<compile_context>
chip_gen: v7x
topology: tpu7x:2x2x1
jax: 0.10.0
libtpu: 0.0.40
codegen_flags: <defaults>
</compile_context>

<pallas_src>
import math
import functools

import jax
import jax.numpy as jnp
from jax import lax
from jax.experimental import pallas as pl
from jax.experimental.pallas import tpu as pltpu


def _pick_group_size(num_heads, head_dim):
    """Smallest head-group whose output columns are lane-dense (G*D % 128 == 0);
    fall back to all heads (full hidden width, also lane-dense) otherwise."""
    for g in range(1, num_heads + 1):
        if num_heads % g == 0 and (g * head_dim) % 128 == 0:
            return g
    return num_heads


def _tritt_kernel(*refs, heads_per_group, head_dim, has_mask):
    # refs (has_mask=True):  x_ref (1,S,H) | w_ref (NG,H,3GD) bf16 resident |
    #                        b_ref (NG,1,3GD) f32 resident | mask_ref (1,1,S) | o_ref (1,S,GD)
    if has_mask:
        x_ref, w_ref, b_ref, mask_ref, o_ref = refs
    else:
        x_ref, w_ref, b_ref, o_ref = refs
        mask_ref = None

    D = head_dim
    GD = heads_per_group * head_dim
    g = pl.program_id(1)                       # current head group

    x = x_ref[0].astype(jnp.bfloat16)          # (S, H)   bf16 MXU input
    w = w_ref[g]                               # (H, 3GD) bf16, resident in VMEM
    b = b_ref[g]                               # (1, 3GD) f32

    # Fused per-group projection: (S,H) @ (H,3GD) -> (S,3GD), f32 accumulation.
    qkv = jnp.dot(x, w, preferred_element_type=jnp.float32) + b
    qkv = qkv.astype(jnp.bfloat16)             # single cast of the whole (S,3GD)

    cols = []
    for i in range(heads_per_group):           # small static unroll (G heads)
        lo = i * D
        q = qkv[:, lo:lo + D]                  # (S, D) bf16, scale already folded
        k = qkv[:, GD + lo:GD + lo + D]        # (S, D) bf16
        v = qkv[:, 2 * GD + lo:2 * GD + lo + D]

        # q @ k^T without materializing a transpose: contract dim 1 with dim 1.
        s = lax.dot_general(q, k, dimension_numbers=(((1,), (1,)), ((), ())),
                            preferred_element_type=jnp.float32)     # (S, S) f32
        if has_mask:
            s = s + mask_ref[0]                # (1, S) additive mask, bcast over rows

        # Numerically-stable softmax; exp on bf16 (EUP bf16 path on v6e/v7x).
        m = jnp.max(s, axis=-1, keepdims=True)
        e = jnp.exp((s - m).astype(jnp.bfloat16))                   # (S, S) bf16
        denom = jnp.sum(e, axis=-1, keepdims=True, dtype=jnp.float32)

        # Flash-style normalization: scale the (S,D) context, not the (S,S) probs.
        ctx = jnp.dot(e, v, preferred_element_type=jnp.float32)     # (S, D) f32
        cols.append(ctx * pl.reciprocal(denom, approx=True))

    ctx_all = cols[0] if len(cols) == 1 else jnp.concatenate(cols, axis=-1)
    o_ref[0] = ctx_all.astype(o_ref.dtype)     # lane-dense (S, GD) store


def trittention_forward(hidden_states, params, num_heads, attention_mask=None):
    """hidden_states: (B, S, H) float32. attention_mask: (B, S) additive or None."""
    B, S, H = hidden_states.shape
    assert H % num_heads == 0, (H, num_heads)
    D = H // num_heads
    G = _pick_group_size(num_heads, D)
    num_groups = num_heads // G
    GD = G * D
    scale = 1.0 / math.sqrt(D)

    # --- host-side packing (once): fused, input-major, per head-group, bf16 ---
    def split_cols(w_t):                       # (H, H) -> (num_groups, H, GD)
        return jnp.transpose(w_t.reshape(H, num_groups, GD), (1, 0, 2))

    w_groups = jnp.concatenate(
        [split_cols(params["wq"].T * scale),   # fold 1/sqrt(D) into Wq
         split_cols(params["wk"].T),
         split_cols(params["wv"].T)], axis=-1).astype(jnp.bfloat16)   # (NG, H, 3GD)

    def split_bias(bvec):
        return bvec.reshape(num_groups, 1, GD)

    b_groups = jnp.concatenate(
        [split_bias(params["bq"] * scale),
         split_bias(params["bk"]),
         split_bias(params["bv"])], axis=-1).astype(jnp.float32)      # (NG, 1, 3GD)

    has_mask = attention_mask is not None
    inputs = [hidden_states, w_groups, b_groups]
    in_specs = [
        pl.BlockSpec((1, S, H), lambda b, g: (b, 0, 0)),              # x: once per batch
        pl.BlockSpec(memory_space=pltpu.MemorySpace.VMEM),            # W: resident, 1 copy
        pl.BlockSpec(memory_space=pltpu.MemorySpace.VMEM),            # bias: resident
    ]
    if has_mask:
        inputs.append(attention_mask.reshape(B, 1, S).astype(jnp.float32))
        in_specs.append(pl.BlockSpec((1, 1, S), lambda b, g: (b, 0, 0)))

    kernel = functools.partial(_tritt_kernel, heads_per_group=G, head_dim=D,
                               has_mask=has_mask)

    # Generation-aware VMEM budget: 7/8 of physical, capped (<=56 MiB on v7x,
    # <=112 MiB on v5e/v6e).
    try:
        phys_vmem = int(getattr(pltpu.get_tpu_info(), "vmem_capacity_bytes",
                                64 * 1024 * 1024))
    except Exception:
        phys_vmem = 64 * 1024 * 1024
    vmem_limit = min((phys_vmem * 7) // 8, 112 * 1024 * 1024)

    return pl.pallas_call(
        kernel,
        out_shape=jax.ShapeDtypeStruct((B, S, H), hidden_states.dtype),
        grid_spec=pltpu.PrefetchScalarGridSpec(
            num_scalar_prefetch=0,
            grid=(B, num_groups),
            in_specs=in_specs,
            out_specs=pl.BlockSpec((1, S, GD), lambda b, g: (b, 0, g)),
        ),
        compiler_params=pltpu.CompilerParams(
            dimension_semantics=("parallel", "parallel"),
            vmem_limit_bytes=vmem_limit),
    )(*inputs)


def _reference_forward(hidden_states, params, num_heads, attention_mask=None):
    """Plain-JAX reference mirroring the PyTorch forward (eval mode, no dropout)."""
    B, S, H = hidden_states.shape
    D = H // num_heads
    q = hidden_states @ params["wq"].T + params["bq"]
    k = hidden_states @ params["wk"].T + params["bk"]
    v = hidden_states @ params["wv"].T + params["bv"]

    def heads(x):
        return jnp.transpose(x.reshape(B, S, num_heads, D), (0, 2, 1, 3))

    qh, kh, vh = heads(q), heads(k), heads(v)
    scores = jnp.einsum("bhqd,bhkd->bhqk", qh, kh) / math.sqrt(D)
    if attention_mask is not None:
        scores = scores + attention_mask[:, None, None, :]
    probs = jax.nn.softmax(scores, axis=-1)
    ctx = jnp.einsum("bhqk,bhkd->bhqd", probs, vh)
    return jnp.transpose(ctx, (0, 2, 1, 3)).reshape(B, S, num_heads * D)


def init_params(key, hidden_size):
    """Deterministic nn.Linear-style init: U(-1/sqrt(in), 1/sqrt(in))."""
    bound = 1.0 / math.sqrt(hidden_size)
    keys = jax.random.split(key, 6)
    u = lambda k, shape: jax.random.uniform(k, shape, jnp.float32, -bound, bound)
    return {
        "wq": u(keys[0], (hidden_size, hidden_size)), "bq": u(keys[1], (hidden_size,)),
        "wk": u(keys[2], (hidden_size, hidden_size)), "bk": u(keys[3], (hidden_size,)),
        "wv": u(keys[4], (hidden_size, hidden_size)), "bv": u(keys[5], (hidden_size,)),
    }


if __name__ == "__main__":
    B, S, H, NUM_HEADS = 2, 8, 32, 4

    key = jax.random.PRNGKey(0)
    k_params, k_x, k_mask = jax.random.split(key, 3)

    params = init_params(k_params, H)
    hidden_states = jax.random.normal(k_x, (B, S, H), dtype=jnp.float32)
    # Additive attention mask (0 = attend, -10000 = masked), HF convention.
    attention_mask = jnp.where(
        jax.random.uniform(k_mask, (B, S)) > 0.2, 0.0, -10000.0).astype(jnp.float32)

    out = trittention_forward(hidden_states, params, NUM_HEADS, attention_mask)
    out = jax.block_until_ready(out)
    ref = _reference_forward(hidden_states, params, NUM_HEADS, attention_mask)
    assert out.shape == (B, S, H), out.shape
    # bf16 MXU inputs, bf16 exp and approx reciprocal -> bf16-class tolerance.
    assert jnp.allclose(out, ref, atol=3e-2, rtol=3e-2), \
        float(jnp.max(jnp.abs(out - ref)))

    # Also exercise the mask=None specialization (no mask DMA / adds).
    out_nm = jax.block_until_ready(
        trittention_forward(hidden_states, params, NUM_HEADS, None))
    ref_nm = _reference_forward(hidden_states, params, NUM_HEADS, None)
    assert jnp.allclose(out_nm, ref_nm, atol=3e-2, rtol=3e-2), \
        float(jnp.max(jnp.abs(out_nm - ref_nm)))

    print("KERNEL_OK")
</pallas_src>

<mosaic_0001>
module attributes {stable_mosaic.version = 11 : i64} {
  func.func @_tritt_kernel(%arg0: i32, %arg1: i32, %arg2: memref<1x8x32xf32, #tpu.memory_space<vmem>>, %arg3: memref<1x32x96xbf16, #tpu.memory_space<vmem>>, %arg4: memref<1x1x96xf32, #tpu.memory_space<vmem>>, %arg5: memref<1x1x8xf32, #tpu.memory_space<vmem>>, %arg6: memref<1x8x32xf32, #tpu.memory_space<vmem>>) attributes {dimension_semantics = [#tpu.dimension_semantics<parallel>, #tpu.dimension_semantics<parallel>], iteration_bounds = array<i64: 2, 1>, scalar_prefetch = 0 : i64, scratch_operands = 0 : i64, tpu.core_type = #tpu.core_type<tc>, window_params = [{transform_indices = @transform_0, window_bounds = array<i64: 1, 8, 32>}, {pipeline_mode = #tpu.pipeline_mode<synchronous>, transform_indices = @transform_1, window_bounds = array<i64: 1, 32, 96>}, {pipeline_mode = #tpu.pipeline_mode<synchronous>, transform_indices = @transform_2, window_bounds = array<i64: 1, 1, 96>}, {transform_indices = @transform_3, window_bounds = array<i64: 1, 1, 8>}, {transform_indices = @transform_4, window_bounds = array<i64: 1, 8, 32>}]} {
    %c0 = arith.constant 0 : index
    %c0_0 = arith.constant 0 : index
    %c0_1 = arith.constant 0 : index
    %0 = vector.load %arg2[%c0, %c0_0, %c0_1] : memref<1x8x32xf32, #tpu.memory_space<vmem>>, vector<1x8x32xf32>
    %1 = vector.shape_cast %0 : vector<1x8x32xf32> to vector<8x32xf32>
    %2 = arith.truncf %1 : vector<8x32xf32> to vector<8x32xbf16>
    %3 = arith.index_cast %arg1 : i32 to index
    %c0_2 = arith.constant 0 : index
    %c0_3 = arith.constant 0 : index
    %4 = vector.load %arg3[%3, %c0_2, %c0_3] : memref<1x32x96xbf16, #tpu.memory_space<vmem>>, vector<1x32x96xbf16>
    %5 = vector.shape_cast %4 : vector<1x32x96xbf16> to vector<32x96xbf16>
    %6 = arith.index_cast %arg1 : i32 to index
    %c0_4 = arith.constant 0 : index
    %c0_5 = arith.constant 0 : index
    %7 = vector.load %arg4[%6, %c0_4, %c0_5] : memref<1x1x96xf32, #tpu.memory_space<vmem>>, vector<1x1x96xf32>
    %8 = vector.shape_cast %7 : vector<1x1x96xf32> to vector<1x96xf32>
    %cst = arith.constant dense<0.000000e+00> : vector<8x96xf32>
    %9 = tpu.matmul %2, %5, %cst {dimension_numbers = #tpu.dot_dimension_numbers<[1], [0], [0], [1], [0, 0, 1, 1], [], []>} : vector<8x32xbf16>, vector<32x96xbf16>, vector<8x96xf32> -> vector<8x96xf32>
    %10 = vector.broadcast %8 : vector<1x96xf32> to vector<8x96xf32>
    %11 = arith.addf %9, %10 : vector<8x96xf32>
    %12 = arith.truncf %11 : vector<8x96xf32> to vector<8x96xbf16>
    %13 = vector.extract_strided_slice %12 {offsets = [0, 0], sizes = [8, 8], strides = [1, 1]} : vector<8x96xbf16> to vector<8x8xbf16>
    %14 = vector.extract_strided_slice %12 {offsets = [0, 32], sizes = [8, 8], strides = [1, 1]} : vector<8x96xbf16> to vector<8x8xbf16>
    %15 = vector.extract_strided_slice %12 {offsets = [0, 64], sizes = [8, 8], strides = [1, 1]} : vector<8x96xbf16> to vector<8x8xbf16>
    %cst_6 = arith.constant dense<0.000000e+00> : vector<8x8xf32>
    %16 = tpu.matmul %13, %14, %cst_6 {dimension_numbers = #tpu.dot_dimension_numbers<[1], [1], [0], [0], [0, 0, 1, 0], [], []>} : vector<8x8xbf16>, vector<8x8xbf16>, vector<8x8xf32> -> vector<8x8xf32>
    %c0_7 = arith.constant 0 : index
    %c0_8 = arith.constant 0 : index
    %c0_9 = arith.constant 0 : index
    %17 = vector.load %arg5[%c0_7, %c0_8, %c0_9] : memref<1x1x8xf32, #tpu.memory_space<vmem>>, vector<1x1x8xf32>
    %18 = vector.shape_cast %17 : vector<1x1x8xf32> to vector<1x8xf32>
    %19 = vector.broadcast %18 : vector<1x8xf32> to vector<8x8xf32>
    %20 = arith.addf %16, %19 : vector<8x8xf32>
    %cst_10 = arith.constant dense<0xFF800000> : vector<8xf32>
    %21 = vector.multi_reduction <maximumf>, %20, %cst_10 [1] : vector<8x8xf32> to vector<8xf32>
    %22 = vector.shape_cast %21 : vector<8xf32> to vector<8x1xf32>
    %23 = vector.broadcast %22 : vector<8x1xf32> to vector<8x8xf32>
    %24 = arith.subf %20, %23 : vector<8x8xf32>
    %25 = arith.truncf %24 : vector<8x8xf32> to vector<8x8xbf16>
    %26 = math.exp %25 : vector<8x8xbf16>
    %27 = arith.extf %26 : vector<8x8xbf16> to vector<8x8xf32>
    %cst_11 = arith.constant dense<0.000000e+00> : vector<8xf32>
    %28 = vector.multi_reduction <add>, %27, %cst_11 [1] : vector<8x8xf32> to vector<8xf32>
    %29 = vector.shape_cast %28 : vector<8xf32> to vector<8x1xf32>
    %cst_12 = arith.constant dense<0.000000e+00> : vector<8x8xf32>
    %30 = tpu.matmul %26, %15, %cst_12 {dimension_numbers = #tpu.dot_dimension_numbers<[1], [0], [0], [1], [0, 0, 1, 1], [], []>} : vector<8x8xbf16>, vector<8x8xbf16>, vector<8x8xf32> -> vector<8x8xf32>
    %31 = tpu.reciprocal %29 {approx = true} : vector<8x1xf32> -> vector<8x1xf32>
    %32 = vector.broadcast %31 : vector<8x1xf32> to vector<8x8xf32>
    %33 = arith.mulf %30, %32 : vector<8x8xf32>
    %34 = vector.extract_strided_slice %12 {offsets = [0, 8], sizes = [8, 8], strides = [1, 1]} : vector<8x96xbf16> to vector<8x8xbf16>
    %35 = vector.extract_strided_slice %12 {offsets = [0, 40], sizes = [8, 8], strides = [1, 1]} : vector<8x96xbf16> to vector<8x8xbf16>
    %36 = vector.extract_strided_slice %12 {offsets = [0, 72], sizes = [8, 8], strides = [1, 1]} : vector<8x96xbf16> to vector<8x8xbf16>
    %cst_13 = arith.constant dense<0.000000e+00> : vector<8x8xf32>
    %37 = tpu.matmul %34, %35, %cst_13 {dimension_numbers = #tpu.dot_dimension_numbers<[1], [1], [0], [0], [0, 0, 1, 0], [], []>} : vector<8x8xbf16>, vector<8x8xbf16>, vector<8x8xf32> -> vector<8x8xf32>
    %c0_14 = arith.constant 0 : index
    %c0_15 = arith.constant 0 : index
    %c0_16 = arith.constant 0 : index
    %38 = vector.load %arg5[%c0_14, %c0_15, %c0_16] : memref<1x1x8xf32, #tpu.memory_space<vmem>>, vector<1x1x8xf32>
    %39 = vector.shape_cast %38 : vector<1x1x8xf32> to vector<1x8xf32>
    %40 = vector.broadcast %39 : vector<1x8xf32> to vector<8x8xf32>
    %41 = arith.addf %37, %40 : vector<8x8xf32>
    %cst_17 = arith.constant dense<0xFF800000> : vector<8xf32>
    %42 = vector.multi_reduction <maximumf>, %41, %cst_17 [1] : vector<8x8xf32> to vector<8xf32>
    %43 = vector.shape_cast %42 : vector<8xf32> to vector<8x1xf32>
    %44 = vector.broadcast %43 : vector<8x1xf32> to vector<8x8xf32>
    %45 = arith.subf %41, %44 : vector<8x8xf32>
    %46 = arith.truncf %45 : vector<8x8xf32> to vector<8x8xbf16>
    %47 = math.exp %46 : vector<8x8xbf16>
    %48 = arith.extf %47 : vector<8x8xbf16> to vector<8x8xf32>
    %cst_18 = arith.constant dense<0.000000e+00> : vector<8xf32>
    %49 = vector.multi_reduction <add>, %48, %cst_18 [1] : vector<8x8xf32> to vector<8xf32>
    %50 = vector.shape_cast %49 : vector<8xf32> to vector<8x1xf32>
    %cst_19 = arith.constant dense<0.000000e+00> : vector<8x8xf32>
    %51 = tpu.matmul %47, %36, %cst_19 {dimension_numbers = #tpu.dot_dimension_numbers<[1], [0], [0], [1], [0, 0, 1, 1], [], []>} : vector<8x8xbf16>, vector<8x8xbf16>, vector<8x8xf32> -> vector<8x8xf32>
    %52 = tpu.reciprocal %50 {approx = true} : vector<8x1xf32> -> vector<8x1xf32>
    %53 = vector.broadcast %52 : vector<8x1xf32> to vector<8x8xf32>
    %54 = arith.mulf %51, %53 : vector<8x8xf32>
    %55 = vector.extract_strided_slice %12 {offsets = [0, 16], sizes = [8, 8], strides = [1, 1]} : vector<8x96xbf16> to vector<8x8xbf16>
    %56 = vector.extract_strided_slice %12 {offsets = [0, 48], sizes = [8, 8], strides = [1, 1]} : vector<8x96xbf16> to vector<8x8xbf16>
    %57 = vector.extract_strided_slice %12 {offsets = [0, 80], sizes = [8, 8], strides = [1, 1]} : vector<8x96xbf16> to vector<8x8xbf16>
    %cst_20 = arith.constant dense<0.000000e+00> : vector<8x8xf32>
    %58 = tpu.matmul %55, %56, %cst_20 {dimension_numbers = #tpu.dot_dimension_numbers<[1], [1], [0], [0], [0, 0, 1, 0], [], []>} : vector<8x8xbf16>, vector<8x8xbf16>, vector<8x8xf32> -> vector<8x8xf32>
    %c0_21 = arith.constant 0 : index
    %c0_22 = arith.constant 0 : index
    %c0_23 = arith.constant 0 : index
    %59 = vector.load %arg5[%c0_21, %c0_22, %c0_23] : memref<1x1x8xf32, #tpu.memory_space<vmem>>, vector<1x1x8xf32>
    %60 = vector.shape_cast %59 : vector<1x1x8xf32> to vector<1x8xf32>
    %61 = vector.broadcast %60 : vector<1x8xf32> to vector<8x8xf32>
    %62 = arith.addf %58, %61 : vector<8x8xf32>
    %cst_24 = arith.constant dense<0xFF800000> : vector<8xf32>
    %63 = vector.multi_reduction <maximumf>, %62, %cst_24 [1] : vector<8x8xf32> to vector<8xf32>
    %64 = vector.shape_cast %63 : vector<8xf32> to vector<8x1xf32>
    %65 = vector.broadcast %64 : vector<8x1xf32> to vector<8x8xf32>
    %66 = arith.subf %62, %65 : vector<8x8xf32>
    %67 = arith.truncf %66 : vector<8x8xf32> to vector<8x8xbf16>
    %68 = math.exp %67 : vector<8x8xbf16>
    %69 = arith.extf %68 : vector<8x8xbf16> to vector<8x8xf32>
    %cst_25 = arith.constant dense<0.000000e+00> : vector<8xf32>
    %70 = vector.multi_reduction <add>, %69, %cst_25 [1] : vector<8x8xf32> to vector<8xf32>
    %71 = vector.shape_cast %70 : vector<8xf32> to vector<8x1xf32>
    %cst_26 = arith.constant dense<0.000000e+00> : vector<8x8xf32>
    %72 = tpu.matmul %68, %57, %cst_26 {dimension_numbers = #tpu.dot_dimension_numbers<[1], [0], [0], [1], [0, 0, 1, 1], [], []>} : vector<8x8xbf16>, vector<8x8xbf16>, vector<8x8xf32> -> vector<8x8xf32>
    %73 = tpu.reciprocal %71 {approx = true} : vector<8x1xf32> -> vector<8x1xf32>
    %74 = vector.broadcast %73 : vector<8x1xf32> to vector<8x8xf32>
    %75 = arith.mulf %72, %74 : vector<8x8xf32>
    %76 = vector.extract_strided_slice %12 {offsets = [0, 24], sizes = [8, 8], strides = [1, 1]} : vector<8x96xbf16> to vector<8x8xbf16>
    %77 = vector.extract_strided_slice %12 {offsets = [0, 56], sizes = [8, 8], strides = [1, 1]} : vector<8x96xbf16> to vector<8x8xbf16>
    %78 = vector.extract_strided_slice %12 {offsets = [0, 88], sizes = [8, 8], strides = [1, 1]} : vector<8x96xbf16> to vector<8x8xbf16>
    %cst_27 = arith.constant dense<0.000000e+00> : vector<8x8xf32>
    %79 = tpu.matmul %76, %77, %cst_27 {dimension_numbers = #tpu.dot_dimension_numbers<[1], [1], [0], [0], [0, 0, 1, 0], [], []>} : vector<8x8xbf16>, vector<8x8xbf16>, vector<8x8xf32> -> vector<8x8xf32>
    %c0_28 = arith.constant 0 : index
    %c0_29 = arith.constant 0 : index
    %c0_30 = arith.constant 0 : index
    %80 = vector.load %arg5[%c0_28, %c0_29, %c0_30] : memref<1x1x8xf32, #tpu.memory_space<vmem>>, vector<1x1x8xf32>
    %81 = vector.shape_cast %80 : vector<1x1x8xf32> to vector<1x8xf32>
    %82 = vector.broadcast %81 : vector<1x8xf32> to vector<8x8xf32>
    %83 = arith.addf %79, %82 : vector<8x8xf32>
    %cst_31 = arith.constant dense<0xFF800000> : vector<8xf32>
    %84 = vector.multi_reduction <maximumf>, %83, %cst_31 [1] : vector<8x8xf32> to vector<8xf32>
    %85 = vector.shape_cast %84 : vector<8xf32> to vector<8x1xf32>
    %86 = vector.broadcast %85 : vector<8x1xf32> to vector<8x8xf32>
    %87 = arith.subf %83, %86 : vector<8x8xf32>
    %88 = arith.truncf %87 : vector<8x8xf32> to vector<8x8xbf16>
    %89 = math.exp %88 : vector<8x8xbf16>
    %90 = arith.extf %89 : vector<8x8xbf16> to vector<8x8xf32>
    %cst_32 = arith.constant dense<0.000000e+00> : vector<8xf32>
    %91 = vector.multi_reduction <add>, %90, %cst_32 [1] : vector<8x8xf32> to vector<8xf32>
    %92 = vector.shape_cast %91 : vector<8xf32> to vector<8x1xf32>
    %cst_33 = arith.constant dense<0.000000e+00> : vector<8x8xf32>
    %93 = tpu.matmul %89, %78, %cst_33 {dimension_numbers = #tpu.dot_dimension_numbers<[1], [0], [0], [1], [0, 0, 1, 1], [], []>} : vector<8x8xbf16>, vector<8x8xbf16>, vector<8x8xf32> -> vector<8x8xf32>
    %94 = tpu.reciprocal %92 {approx = true} : vector<8x1xf32> -> vector<8x1xf32>
    %95 = vector.broadcast %94 : vector<8x1xf32> to vector<8x8xf32>
    %96 = arith.mulf %93, %95 : vector<8x8xf32>
    %97 = tpu.concatenate %33, %54, %75, %96 in 1 : vector<8x8xf32>, vector<8x8xf32>, vector<8x8xf32>, vector<8x8xf32> -> vector<8x32xf32>
    %c0_34 = arith.constant 0 : index
    %c0_35 = arith.constant 0 : index
    %c0_36 = arith.constant 0 : index
    %98 = vector.load %arg6[%c0_34, %c0_35, %c0_36] : memref<1x8x32xf32, #tpu.memory_space<vmem>>, vector<1x8x32xf32>
    %99 = vector.shape_cast %98 : vector<1x8x32xf32> to vector<8x32xf32>
    %100 = vector.shape_cast %97 : vector<8x32xf32> to vector<1x8x32xf32>
    tpu.vector_store %arg6[%c0_34, %c0_35, %c0_36], %100 {strides = array<i32>} : memref<1x8x32xf32, #tpu.memory_space<vmem>>, vector<1x8x32xf32>,
    return
  }
  func.func @transform_0(%arg0: i32, %arg1: i32) -> (i32, i32, i32) {
    %c0_i32 = arith.constant 0 : i32
    %c0_i32_0 = arith.constant 0 : i32
    %c0_i32_1 = arith.constant 0 : i32
    return %arg0, %c0_i32, %c0_i32_0 : i32, i32, i32
  }
  func.func @transform_1(%arg0: i32, %arg1: i32) -> (i32, i32, i32) {
    %c0_i32 = arith.constant 0 : i32
    %c0_i32_0 = arith.constant 0 : i32
    %c0_i32_1 = arith.constant 0 : i32
    %c0_i32_2 = arith.constant 0 : i32
    return %c0_i32, %c0_i32_0, %c0_i32_1 : i32, i32, i32
  }
  func.func @transform_2(%arg0: i32, %arg1: i32) -> (i32, i32, i32) {
    %c0_i32 = arith.constant 0 : i32
    %c0_i32_0 = arith.constant 0 : i32
    %c0_i32_1 = arith.constant 0 : i32
    %c0_i32_2 = arith.constant 0 : i32
    return %c0_i32, %c0_i32_0, %c0_i32_1 : i32, i32, i32
  }
  func.func @transform_3(%arg0: i32, %arg1: i32) -> (i32, i32, i32) {
    %c0_i32 = arith.constant 0 : i32
    %c0_i32_0 = arith.constant 0 : i32
    %c0_i32_1 = arith.constant 0 : i32
    return %arg0, %c0_i32, %c0_i32_0 : i32, i32, i32
  }
  func.func @transform_4(%arg0: i32, %arg1: i32) -> (i32, i32, i32) {
    %c0_i32 = arith.constant 0 : i32
    %c0_i32_0 = arith.constant 0 : i32
    return %arg0, %c0_i32, %arg1 : i32, i32, i32
  }
}

</mosaic_0001>

<llo_original>
// kernel: tpu_custom_call.1
$region0: #{tpu_custom_call.1}
  #allocation0 [shape = 'u32[]', space=smem, size = 0x4, offset = 0x4, fixed_abs, tag = 'smem constant byte address 0x4 - core index']
  #allocation1 [shape = 'u32[144,128]{1,0:T(1,128)}', space=vmem, size = 0x12000, scoped, tag = 'internal scratch']
  %s0 = inlined_call_operand.hbm [shape: f32[2,8,32], index: 0, kind: input, shape index: {}]
  %s1 = inlined_call_operand.hbm [shape: bf16[1,32,96], index: 1, kind: input, shape index: {}]
  %s2 = inlined_call_operand.vmem [shape: f32[1,1,96], index: 2, kind: input, shape index: {}]
  %s3 = inlined_call_operand.vmem [shape: f32[2,1,8], index: 3, kind: input, shape index: {}]
  %s4 = inlined_call_operand.hbm [shape: f32[2,8,32], index: 4, kind: output, shape index: {}]
  %s5 = sld [smem:[#allocation0]]
  $region57: #{tpu_custom_call.1} parent=0
    _
  %s7 = ssub.s32 1, %s5
  %s8 = scalar_select 0, %s7, %s5
  $region1: #{tpu_custom_call.1} parent=0
    #allocation2 [shape = 'u8[8192]{0}', space=vmem, size = 0x2000, scoped, tag = 'input window, operand 0']
    #allocation3 [shape = 's32[2]{0}', space=sflag, size = 0x8, scoped, tag = 'scoped memory for tpu_custom_call.1']
    #allocation4 [shape = 's32[2]{0}', space=sflag, size = 0x8, scoped, tag = 'scoped memory for tpu_custom_call.1']
    #allocation5 [shape = 'u8[8192]{0}', space=vmem, size = 0x2000, scoped, tag = 'input window, operand 1, single buffered']
    #allocation6 [shape = 's32[1]{0}', space=sflag, size = 0x4, scoped, tag = 'scoped memory for tpu_custom_call.1']
    #allocation7 [shape = 'u8[8192]{0}', space=vmem, size = 0x2000, scoped, tag = 'output window, operand 0']
    %9 = vsyncpa [#allocation3], 0
    %s10 = scalar_lea.sflag [#allocation3], 1
    %11 = vsyncpa %s10, 0
    %12 = vsyncpa [#allocation6], 0
    %13 = vsyncpa [#allocation4], 0
    %s14 = scalar_lea.sflag [#allocation4], 1
    %15 = vsyncpa %s14, 0
    loop: start=0, step=1, limit=4
    $region2: #{tpu_custom_call.1} parent=1 // loop_pre_header
      _
    $region3: #{tpu_custom_call.1} parent=1 // loop_header
      %s17 = sphi 0, %s21
      %p18 = scmp.ge.s32.totalorder %s17, 4
      %s24 = sphi 0, %s36
      %s25 = sphi 0, %s32
      %s26 = sphi 0, %s24
      %s27 = sphi 0, %s25
      %s28 = sphi 0, %s26
      %s29 = sphi 0, %s27
      %s39 = sphi 0, %s41
      %s42 = sphi 0, %s39
      %s43 = sphi 0, %s42
      %s59 = sphi 0, %s43
      %s63 = sphi 0, %s63
      %s65 = sphi 0, %s63
      %s66 = sphi 0, %s65
      %s80 = sphi 0, %s66
      %s84 = sphi 0, %s84
      %s86 = sphi 0, %s84
      %s87 = sphi 0, %s86
      %s101 = sphi 0, %s87
      %s107 = sphi 0, %s109
      %s110 = sphi 0, %s107
      %s111 = sphi 0, %s110
      %s127 = sphi 0, %s111
      %s135 = sphi 0, %s137
      %s138 = sphi 0, %s135
      %s139 = sphi 0, %s138
      %s155 = sphi 0, %s139
    $region4: #{tpu_custom_call.1} parent=1 // loop_header_branch
      %20 = sbr.rel (%p18) target = $region8
    $region5: #{tpu_custom_call.1} parent=1 // loop_body
      %s22 = ssub.s32 %s17, 1
      %s23 = ssub.s32 %s17, 2
      %s30 = sadd.s32 1, %s25
      %p31 = scmp.ge.s32.totalorder %s30, 1
      %s32 = scalar_select %p31, 0, %s30
      %s33 = sadd.s32 1, %s24
      %s34 = scalar_select %p31, %s33, %s24
      %p35 = scmp.ge.s32.totalorder %s34, 2
      %s36 = scalar_select %p35, 0, %s34
      %s37 = ssub.s32 %s24, %s36
      %p38 = scmp.eq.s32.totalorder %s37, 0
      %s40 = sadd.s32 %s39, 1
      %s41 = scalar_select %p38, %s39, %s40
      %p44 = pneg %p38
      %p45 = scmp.eq.s32.totalorder %s17, 1
      %p46 = por %p44, %p45
      %p47 = scmp.ne.s32.totalorder %s39, %s42
      %p48 = scmp.eq.s32.totalorder %s17, 0
      %p49 = por %p47, %p48
      %p50 = scmp.ne.s32.totalorder %s39, %s42
      %p51 = scmp.eq.s32.totalorder %s22, 1
      %p52 = por %p50, %p51
      %p53 = scmp.ne.s32.totalorder %s42, %s43
      %p54 = scmp.eq.s32.totalorder %s22, 0
      %p55 = por %p53, %p54
      %p56 = scmp.ne.s32.totalorder %s42, %s43
      %p57 = scmp.eq.s32.totalorder %s23, 1
      %p58 = por %p56, %p57
      %p60 = scmp.ne.s32.totalorder %s43, %s59
      %p61 = scmp.eq.s32.totalorder %s23, 0
      %p62 = por %p60, %p61
      %s64 = sadd.s32 %s63, 1
      %p67 = scmp.eq.s32.totalorder %s17, 1
      %p68 = scmp.ne.s32.totalorder %s63, %s65
      %p69 = scmp.eq.s32.totalorder %s17, 0
      %p70 = por %p68, %p69
      %p71 = scmp.ne.s32.totalorder %s63, %s65
      %p72 = scmp.eq.s32.totalorder %s22, 1
      %p73 = por %p71, %p72
      %p74 = scmp.ne.s32.totalorder %s65, %s66
      %p75 = scmp.eq.s32.totalorder %s22, 0
      %p76 = por %p74, %p75
      %p77 = scmp.ne.s32.totalorder %s65, %s66
      %p78 = scmp.eq.s32.totalorder %s23, 1
      %p79 = por %p77, %p78
      %p81 = scmp.ne.s32.totalorder %s66, %s80
      %p82 = scmp.eq.s32.totalorder %s23, 0
      %p83 = por %p81, %p82
      %s85 = sadd.s32 %s84, 1
      %p88 = scmp.eq.s32.totalorder %s17, 1
      %p89 = scmp.ne.s32.totalorder %s84, %s86
      %p90 = scmp.eq.s32.totalorder %s17, 0
      %p91 = por %p89, %p90
      %p92 = scmp.ne.s32.totalorder %s84, %s86
      %p93 = scmp.eq.s32.totalorder %s22, 1
      %p94 = por %p92, %p93
      %p95 = scmp.ne.s32.totalorder %s86, %s87
      %p96 = scmp.eq.s32.totalorder %s22, 0
      %p97 = por %p95, %p96
      %p98 = scmp.ne.s32.totalorder %s86, %s87
      %p99 = scmp.eq.s32.totalorder %s23, 1
      %p100 = por %p98, %p99
      %p102 = scmp.ne.s32.totalorder %s87, %s101
      %p103 = scmp.eq.s32.totalorder %s23, 0
      %p104 = por %p102, %p103
      %s105 = ssub.s32 %s24, %s36
      %p106 = scmp.eq.s32.totalorder %s105, 0
      %s108 = sadd.s32 %s107, 1
      %s109 = scalar_select %p106, %s107, %s108
      %p112 = pneg %p106
      %p113 = scmp.eq.s32.totalorder %s17, 1
      %p114 = por %p112, %p113
      %p115 = scmp.ne.s32.totalorder %s107, %s110
      %p116 = scmp.eq.s32.totalorder %s17, 0
      %p117 = por %p115, %p116
      %p118 = scmp.ne.s32.totalorder %s107, %s110
      %p119 = scmp.eq.s32.totalorder %s22, 1
      %p120 = por %p118, %p119
      %p121 = scmp.ne.s32.totalorder %s110, %s111
      %p122 = scmp.eq.s32.totalorder %s22, 0
      %p123 = por %p121, %p122
      %p124 = scmp.ne.s32.totalorder %s110, %s111
      %p125 = scmp.eq.s32.totalorder %s23, 1
      %p126 = por %p124, %p125
      %p128 = scmp.ne.s32.totalorder %s111, %s127
      %p129 = scmp.eq.s32.totalorder %s23, 0
      %p130 = por %p128, %p129
      %s131 = ssub.s32 %s24, %s36
      %s132 = ssub.s32 %s25, %s32
      %s133 = sor.u32 %s131, %s132
      %p134 = scmp.eq.s32.totalorder %s133, 0
      %s136 = sadd.s32 %s135, 1
      %s137 = scalar_select %p134, %s135, %s136
      %p140 = pneg %p134
      %p141 = scmp.eq.s32.totalorder %s17, 1
      %p142 = por %p140, %p141
      %p143 = scmp.ne.s32.totalorder %s135, %s138
      %p144 = scmp.eq.s32.totalorder %s17, 0
      %p145 = por %p143, %p144
      %p146 = scmp.ne.s32.totalorder %s135, %s138
      %p147 = scmp.eq.s32.totalorder %s22, 1
      %p148 = por %p146, %p147
      %p149 = scmp.ne.s32.totalorder %s138, %s139
      %p150 = scmp.eq.s32.totalorder %s22, 0
      %p151 = por %p149, %p150
      %p152 = scmp.ne.s32.totalorder %s138, %s139
      %p153 = scmp.eq.s32.totalorder %s23, 1
      %p154 = por %p152, %p153
      %p156 = scmp.ne.s32.totalorder %s139, %s155
      %p157 = scmp.eq.s32.totalorder %s23, 0
      %p158 = por %p156, %p157
      %p159 = scmp.le.s32.totalorder 1, %s17
      %p160 = scmp.lt.s32.totalorder %s17, 3
      %p161 = pnand %p159, %p160
      %p162 = pneg %p161
      // Predicated region
      $region9: #{tpu_custom_call.1} parent=5 // pred_check
        _
      $region10: #{tpu_custom_call.1} parent=5 // pred_check_branch
        %164 = sbr.rel (%p161) target = $region12
      $region11: #{tpu_custom_call.1} parent=5 // pred_region
        %s165 = ssub.s32 %s17, 1
        // Predicated region
        $region13: #{tpu_custom_call.1} parent=11 // pred_check
          %p166 = pneg %p76
        $region14: #{tpu_custom_call.1} parent=11 // pred_check_branch
          %168 = sbr.rel (%p166) target = $region16
        $region15: #{tpu_custom_call.1} parent=11 // pred_region
          %s170 = ssub.s32 256, 256
          %171 = vsyncadd [#allocation6], %s170
          %s172 = sshll.u32 [#allocation5], 4
          %s173 = int_to_ptr.vmem [resolvable:$true] %s172
          %178 = dma.hbm_to_vmem [thread:$0]  %s1, 256, %s173, [#allocation6], 64, 64, 4
        $region16: #{tpu_custom_call.1} parent=11 // pred_fallthru
          _
        // Predicated region
        $region17: #{tpu_custom_call.1} parent=11 // pred_check
          %p179 = pneg %p97
        $region18: #{tpu_custom_call.1} parent=11 // pred_check_branch
          %181 = sbr.rel (%p179) target = $region20
        $region19: #{tpu_custom_call.1} parent=11 // pred_region
          _
        $region20: #{tpu_custom_call.1} parent=11 // pred_fallthru
          _
      $region12: #{tpu_custom_call.1} parent=5 // pred_fallthru
        _
      %p182 = scmp.lt.s32.totalorder %s17, 2
      // Predicated region
      $region21: #{tpu_custom_call.1} parent=5 // pred_check
        %p183 = pneg %p182
      $region22: #{tpu_custom_call.1} parent=5 // pred_check_branch
        %185 = sbr.rel (%p183) target = $region24
      $region23: #{tpu_custom_call.1} parent=5 // pred_region
        // Predicated region
        $region25: #{tpu_custom_call.1} parent=23 // pred_check
          %p186 = pneg %p49
        $region26: #{tpu_custom_call.1} parent=23 // pred_check_branch
          %188 = sbr.rel (%p186) target = $region28
        $region27: #{tpu_custom_call.1} parent=23 // pred_region
          %s189 = sand.u32 %s39, 1
          %s190 = scalar_lea.sflag [#allocation3], %s189
          %s191 = sand.u32 %s39, 1
          %s192 = smul.addr %s191, 8
          %s193 = scalar_lea.vmem [#allocation2], %s192
          %s195 = ssub.s32 128, 128
          %196 = vsyncadd %s190, %s195
          %s197 = smul.addr %s24, 128
          %s198 = scalar_lea.hbm %s0, %s197
          %s200 = sshll.u32 %s193, 4
          %s201 = int_to_ptr.vmem [resolvable:$true] %s200
          %203 = dma.hbm_to_vmem [thread:$0]  %s198, 128, %s201, %s190
        $region28: #{tpu_custom_call.1} parent=23 // pred_fallthru
          _
        // Predicated region
        $region29: #{tpu_custom_call.1} parent=23 // pred_check
          %p204 = pneg %p117
        $region30: #{tpu_custom_call.1} parent=23 // pred_check_branch
          %206 = sbr.rel (%p204) target = $region32
        $region31: #{tpu_custom_call.1} parent=23 // pred_region
          %p207 = scmp.lt.s32.totalorder %s24, 1
          %s208 = scalar_select %p207, %s24, 1
          %s209 = scalar_lea.vmem %s3, %s208
        $region32: #{tpu_custom_call.1} parent=23 // pred_fallthru
          _
      $region24: #{tpu_custom_call.1} parent=5 // pred_fallthru
        _
      %p210 = scmp.le.s32.totalorder 1, %s17
      %p211 = scmp.lt.s32.totalorder %s17, 3
      %p212 = pnand %p210, %p211
      %p213 = pneg %p212
      // Predicated region
      $region33: #{tpu_custom_call.1} parent=5 // pred_check
        _
      $region34: #{tpu_custom_call.1} parent=5 // pred_check_branch
        %215 = sbr.rel (%p212) target = $region36
      $region35: #{tpu_custom_call.1} parent=5 // pred_region
        %s216 = ssub.s32 %s17, 1
        %s217 = sand.u32 %s42, 1
        %s218 = scalar_lea.sflag [#allocation3], %s217
        %s219 = sand.u32 %s42, 1
        %s220 = smul.addr %s219, 8
        %s221 = scalar_lea.vmem [#allocation2], %s220
        // Predicated region
        $region37: #{tpu_custom_call.1} parent=35 // pred_check
          %p222 = pneg %p55
        $region38: #{tpu_custom_call.1} parent=35 // pred_check_branch
          %224 = sbr.rel (%p222) target = $region40
        $region39: #{tpu_custom_call.1} parent=35 // pred_region
          %225 = dma.done %s218, 128
        $region40: #{tpu_custom_call.1} parent=35 // pred_fallthru
          _
        // Predicated region
        $region41: #{tpu_custom_call.1} parent=35 // pred_check
          %p226 = pneg %p76
        $region42: #{tpu_custom_call.1} parent=35 // pred_check_branch
          %228 = sbr.rel (%p226) target = $region44
        $region43: #{tpu_custom_call.1} parent=35 // pred_region
          %229 = dma.done [#allocation6], 256
        $region44: #{tpu_custom_call.1} parent=35 // pred_fallthru
          _
        %s230 = sand.u32 %s42, 1
        %s231 = scalar_lea.sflag [#allocation3], %s230
        %s232 = sand.u32 %s42, 1
        %s233 = smul.addr %s232, 8
        %s234 = scalar_lea.vmem [#allocation2], %s233
        %p235 = pneg %p55
        %p236 = pneg %p52
        %p237 = pneg %p76
        %p238 = pneg %p73
        %p239 = pneg %p97
        %p240 = pneg %p94
        %p241 = scmp.lt.s32.totalorder %s26, 1
        %s242 = scalar_select %p241, %s26, 1
        %s243 = scalar_lea.vmem %s3, %s242
        %p244 = pneg %p123
        %p245 = pneg %p120
        %p246 = pneg %p151
        %p247 = pneg %p148
        %s248 = sand.u32 %s138, 1
        %s249 = scalar_lea.sflag [#allocation4], %s248
        %s250 = sand.u32 %s138, 1
        %s251 = smul.addr %s250, 8
        %s252 = scalar_lea.vmem [#allocation7], %s251
        %p253 = scmp.lt.s32.totalorder %s26, 1
        %s254 = scalar_select %p253, %s26, 1
        %s255 = scalar_lea.vmem %s3, %s254
        %v257 = vld [vmem:[%s221] sm:$0xff]
        %v258 = vpack.c.bf16 %v257, %v257
        %s259 = smul.u32 %s27, 4
        %s260 = smul.addr %s259, 4
        %s261 = scalar_lea.vmem [#allocation5], %s260
        %v262 = vld [vmem:[%s261] sm:$0xf]
        %v263 = vld [vmem:[%s261 + $0x4] sm:$0xf]
        %v264 = vld [vmem:[%s261 + $0x8] sm:$0xf]
        %v265 = vld [vmem:[%s261 + $0xc] sm:$0xf]
        %s266 = scalar_lea.vmem %s2, %s27
        %v267 = vld [vmem:[%s266] sm:$0x1]
        %v269 = vlaneseq
        %v270 = vshrl.u32 %v269, 7
        %v271 = vsub.s32 0, %v270
        %v272 = vrot.slane %v267, %v271
        %v278 = vunpack.c.l.b16 %v262
        %v279 = vunpack.c.l.b16 %v263
        %v280 = vunpack.c.l.b16 %v264
        %v281 = vunpack.c.l.b16 %v265
        %v282 = vpack.c.b16 %v279, %v278
        %v283 = vpack.c.b16 %v281, %v280
        %vm286 = vcmask 261120
        %v288 = vsel %vm286, %v258, 0
        %290 = vmatprep.subr.bf16.mxu0 0
        %291 = vmatpush1.bf16.msra.mxu0 %v282
        %292 = vmatprep.subr.bf16.mxu0 0
        %293 = vmatpush1.bf16.msra.mxu0 %v283
        %294 = vmatprep.subr.bf16.mxu0 0
        %295 = vmatpush1.bf16.msra.mxu0 0
        %296 = vmatprep.subr.bf16.mxu0 0
        %297 = vmatpush1.bf16.msra.mxu0 0
        %298 = vmatprep.subr.bf16.mxu0 0
        %299 = vmatpush1.bf16.msra.mxu0 0
        %300 = vmatprep.subr.bf16.mxu0 0
        %301 = vmatpush1.bf16.msra.mxu0 0
        %302 = vmatprep.subr.bf16.mxu0 0
        %303 = vmatpush1.bf16.msra.mxu0 0
        %304 = vmatprep.subr.bf16.mxu0 0
        %305 = vmatpush1.bf16.msra.mxu0 0
        %306 = vmatprep.subr.bf16.mxu0 0
        %307 = vmatpush1.bf16.msra.mxu0 0
        %308 = vmatprep.subr.bf16.mxu0 0
        %309 = vmatpush1.bf16.msra.mxu0 0
        %310 = vmatprep.subr.bf16.mxu0 0
        %311 = vmatpush1.bf16.msra.mxu0 0
        %312 = vmatprep.subr.bf16.mxu0 0
        %313 = vmatpush1.bf16.msra.mxu0 0
        %314 = vmatprep.subr.bf16.mxu0 0
        %315 = vmatpush1.bf16.msra.mxu0 0
        %316 = vmatprep.subr.bf16.mxu0 0
        %317 = vmatpush1.bf16.msra.mxu0 0
        %318 = vmatprep.subr.bf16.mxu0 0
        %319 = vmatpush1.bf16.msra.mxu0 0
        %320 = vmatprep.subr.bf16.mxu0 0
        %321 = vmatpush1.bf16.msra.mxu0 0
        %322 = vmatprep.mubr.bf16.mxu0 0
        %323 = vmatmul.mubr.bf16.gmra.mrb[0].mxu0 %v288
        %v324 = vpop.f32.mrb[0].mxu0
        %v325 = vadd.f32 %v272, %v324
        %v326 = vpop.f32.mrb[0].mxu0
        %v327 = vpop.f32.mrb[0].mxu0
        %v328 = vpop.f32.mrb[0].mxu0
        %329 = vdwg.mxu0
        %v330 = vpack.c.bf16 %v325, %v325
        %v331 = vld [vmem:[%s255] sm:$0x1]
        %v333 = vlaneseq
        %v334 = vshrl.u32 %v333, 7
        %v335 = vsub.s32 0, %v334
        %v336 = vrot.slane %v331, %v335
        %339 = vrot.lane.b32.xlu0 %v330, 96
        %v340 = vpop.permute.xlu0 %339
        %vm341 = vcmask 64512
        %v343 = vsel %vm341, %v330, 0
        %v346 = vsel %vm341, %v340, 0
        %348 = vmatprep.subr.bf16.mxu0 0
        %349 = vmatpush1.bf16.xpose.msra.mxu0 %v346
        %350 = vmatprep.subr.bf16.mxu0 0
        %351 = vmatpush1.bf16.xpose.msra.mxu0 0
        %352 = vmatprep.subr.bf16.mxu0 0
        %353 = vmatpush1.bf16.xpose.msra.mxu0 0
        %354 = vmatprep.subr.bf16.mxu0 0
        %355 = vmatpush1.bf16.xpose.msra.mxu0 0
        %356 = vmatprep.subr.bf16.mxu0 0
        %357 = vmatpush1.bf16.xpose.msra.mxu0 0
        %358 = vmatprep.subr.bf16.mxu0 0
        %359 = vmatpush1.bf16.xpose.msra.mxu0 0
        %360 = vmatprep.subr.bf16.mxu0 0
        %361 = vmatpush1.bf16.xpose.msra.mxu0 0
        %362 = vmatprep.subr.bf16.mxu0 0
        %363 = vmatpush1.bf16.xpose.msra.mxu0 0
        %364 = vmatprep.subr.bf16.mxu0 0
        %365 = vmatpush1.bf16.xpose.msra.mxu0 0
        %366 = vmatprep.subr.bf16.mxu0 0
        %367 = vmatpush1.bf16.xpose.msra.mxu0 0
        %368 = vmatprep.subr.bf16.mxu0 0
        %369 = vmatpush1.bf16.xpose.msra.mxu0 0
        %370 = vmatprep.subr.bf16.mxu0 0
        %371 = vmatpush1.bf16.xpose.msra.mxu0 0
        %372 = vmatprep.subr.bf16.mxu0 0
        %373 = vmatpush1.bf16.xpose.msra.mxu0 0
        %374 = vmatprep.subr.bf16.mxu0 0
        %375 = vmatpush1.bf16.xpose.msra.mxu0 0
        %376 = vmatprep.subr.bf16.mxu0 0
        %377 = vmatpush1.bf16.xpose.msra.mxu0 0
        %378 = vmatprep.subr.bf16.mxu0 0
        %379 = vmatpush1.bf16.xpose.msra.mxu0 0
        %380 = vmatprep.mubr.bf16.mxu0 0
        %381 = vmatmul.mubr.bf16.gmra.mrb[0].mxu0 %v343
        %v382 = vpop.f32.mrb[0].mxu0
        %v383 = vadd.f32 %v336, %v382
        %v384 = vpop.f32.mrb[0].mxu0
        %v385 = vpop.f32.mrb[0].mxu0
        %v386 = vpop.f32.mrb[0].mxu0
        %387 = vdwg.mxu0
        %v388 = vsel %vm341, %v383, -inf
        %389 = vmax.xlane.f32.xlu0 %v388
        %v390 = vpop.xlane.xlu0 %389
        %v391 = vsub.f32 %v383, %v390
        %v392 = vpack.c.bf16 %v391, %v391
        %v394 = vmul.bf16 %v392, 1069105081
        %v395 = vpow.bf16.pop %v394
        %v396 = vunpack.c.l.bf16 %v395
        %v397 = vsel %vm341, %v396, 0.0
        %398 = vadd.xlane.f32.xlu0 %v397
        %v399 = vpop.xlane.xlu0 %398
        %400 = vrot.lane.b32.xlu0 %v330, 64
        %v401 = vpop.permute.xlu0 %400
        %v403 = vsel %vm341, %v395, 0
        %vm405 = vcmask 1043456
        %v407 = vsel %vm405, %v401, 0
        %409 = vmatprep.subr.bf16.mxu0 0
        %410 = vmatpush1.bf16.msra.mxu0 %v407
        %411 = vmatprep.subr.bf16.mxu0 0
        %412 = vmatpush1.bf16.msra.mxu0 0
        %413 = vmatprep.subr.bf16.mxu0 0
        %414 = vmatpush1.bf16.msra.mxu0 0
        %415 = vmatprep.subr.bf16.mxu0 0
        %416 = vmatpush1.bf16.msra.mxu0 0
        %417 = vmatprep.subr.bf16.mxu0 0
        %418 = vmatpush1.bf16.msra.mxu0 0
        %419 = vmatprep.subr.bf16.mxu0 0
        %420 = vmatpush1.bf16.msra.mxu0 0
        %421 = vmatprep.subr.bf16.mxu0 0
        %422 = vmatpush1.bf16.msra.mxu0 0
        %423 = vmatprep.subr.bf16.mxu0 0
        %424 = vmatpush1.bf16.msra.mxu0 0
        %425 = vmatprep.subr.bf16.mxu0 0
        %426 = vmatpush1.bf16.msra.mxu0 0
        %427 = vmatprep.subr.bf16.mxu0 0
        %428 = vmatpush1.bf16.msra.mxu0 0
        %429 = vmatprep.subr.bf16.mxu0 0
        %430 = vmatpush1.bf16.msra.mxu0 0
        %431 = vmatprep.subr.bf16.mxu0 0
        %432 = vmatpush1.bf16.msra.mxu0 0
        %433 = vmatprep.subr.bf16.mxu0 0
        %434 = vmatpush1.bf16.msra.mxu0 0
        %435 = vmatprep.subr.bf16.mxu0 0
        %436 = vmatpush1.bf16.msra.mxu0 0
        %437 = vmatprep.subr.bf16.mxu0 0
        %438 = vmatpush1.bf16.msra.mxu0 0
        %439 = vmatprep.subr.bf16.mxu0 0
        %440 = vmatpush1.bf16.msra.mxu0 0
        %441 = vmatprep.mubr.bf16.mxu0 0
        %442 = vmatmul.mubr.bf16.gmra.mrb[0].mxu0 %v403
        %v443 = vpop.f32.mrb[0].mxu0
        %v444 = vadd.f32 0.0, %v443
        %v445 = vpop.f32.mrb[0].mxu0
        %v446 = vpop.f32.mrb[0].mxu0
        %v447 = vpop.f32.mrb[0].mxu0
        %448 = vdwg.mxu0
        %v449 = vrcp.pop %v399
        %v450 = vmul.f32 %v444, %v449
        %451 = vrot.lane.b32.xlu0 %v330, 120
        %v452 = vpop.permute.xlu0 %451
        %453 = vrot.lane.b32.xlu0 %v330, 88
        %v454 = vpop.permute.xlu0 %453
        %v456 = vsel %vm341, %v452, 0
        %v459 = vsel %vm341, %v454, 0
        %461 = vmatprep.subr.bf16.mxu0 0
        %462 = vmatpush1.bf16.xpose.msra.mxu0 %v459
        %463 = vmatprep.subr.bf16.mxu0 0
        %464 = vmatpush1.bf16.xpose.msra.mxu0 0
        %465 = vmatprep.subr.bf16.mxu0 0
        %466 = vmatpush1.bf16.xpose.msra.mxu0 0
        %467 = vmatprep.subr.bf16.mxu0 0
        %468 = vmatpush1.bf16.xpose.msra.mxu0 0
        %469 = vmatprep.subr.bf16.mxu0 0
        %470 = vmatpush1.bf16.xpose.msra.mxu0 0
        %471 = vmatprep.subr.bf16.mxu0 0
        %472 = vmatpush1.bf16.xpose.msra.mxu0 0
        %473 = vmatprep.subr.bf16.mxu0 0
        %474 = vmatpush1.bf16.xpose.msra.mxu0 0
        %475 = vmatprep.subr.bf16.mxu0 0
        %476 = vmatpush1.bf16.xpose.msra.mxu0 0
        %477 = vmatprep.subr.bf16.mxu0 0
        %478 = vmatpush1.bf16.xpose.msra.mxu0 0
        %479 = vmatprep.subr.bf16.mxu0 0
        %480 = vmatpush1.bf16.xpose.msra.mxu0 0
        %481 = vmatprep.subr.bf16.mxu0 0
        %482 = vmatpush1.bf16.xpose.msra.mxu0 0
        %483 = vmatprep.subr.bf16.mxu0 0
        %484 = vmatpush1.bf16.xpose.msra.mxu0 0
        %485 = vmatprep.subr.bf16.mxu0 0
        %486 = vmatpush1.bf16.xpose.msra.mxu0 0
        %487 = vmatprep.subr.bf16.mxu0 0
        %488 = vmatpush1.bf16.xpose.msra.mxu0 0
        %489 = vmatprep.subr.bf16.mxu0 0
        %490 = vmatpush1.bf16.xpose.msra.mxu0 0
        %491 = vmatprep.subr.bf16.mxu0 0
        %492 = vmatpush1.bf16.xpose.msra.mxu0 0
        %493 = vmatprep.mubr.bf16.mxu0 0
        %494 = vmatmul.mubr.bf16.gmra.mrb[0].mxu0 %v456
        %v495 = vpop.f32.mrb[0].mxu0
        %v496 = vadd.f32 %v336, %v495
        %v497 = vpop.f32.mrb[0].mxu0
        %v498 = vpop.f32.mrb[0].mxu0
        %v499 = vpop.f32.mrb[0].mxu0
        %500 = vdwg.mxu0
        %v501 = vsel %vm341, %v496, -inf
        %502 = vmax.xlane.f32.xlu0 %v501
        %v503 = vpop.xlane.xlu0 %502
        %v504 = vsub.f32 %v496, %v503
        %v505 = vpack.c.bf16 %v504, %v504
        %v507 = vmul.bf16 %v505, 1069105081
        %v508 = vpow.bf16.pop %v507
        %v509 = vunpack.c.l.bf16 %v508
        %v510 = vsel %vm341, %v509, 0.0
        %511 = vadd.xlane.f32.xlu0 %v510
        %v512 = vpop.xlane.xlu0 %511
        %513 = vrot.lane.b32.xlu0 %v330, 56
        %v514 = vpop.permute.xlu0 %513
        %v516 = vsel %vm341, %v508, 0
        %v519 = vsel %vm405, %v514, 0
        %521 = vmatprep.subr.bf16.mxu0 0
        %522 = vmatpush1.bf16.msra.mxu0 %v519
        %523 = vmatprep.subr.bf16.mxu0 0
        %524 = vmatpush1.bf16.msra.mxu0 0
        %525 = vmatprep.subr.bf16.mxu0 0
        %526 = vmatpush1.bf16.msra.mxu0 0
        %527 = vmatprep.subr.bf16.mxu0 0
        %528 = vmatpush1.bf16.msra.mxu0 0
        %529 = vmatprep.subr.bf16.mxu0 0
        %530 = vmatpush1.bf16.msra.mxu0 0
        %531 = vmatprep.subr.bf16.mxu0 0
        %532 = vmatpush1.bf16.msra.mxu0 0
        %533 = vmatprep.subr.bf16.mxu0 0
        %534 = vmatpush1.bf16.msra.mxu0 0
        %535 = vmatprep.subr.bf16.mxu0 0
        %536 = vmatpush1.bf16.msra.mxu0 0
        %537 = vmatprep.subr.bf16.mxu0 0
        %538 = vmatpush1.bf16.msra.mxu0 0
        %539 = vmatprep.subr.bf16.mxu0 0
        %540 = vmatpush1.bf16.msra.mxu0 0
        %541 = vmatprep.subr.bf16.mxu0 0
        %542 = vmatpush1.bf16.msra.mxu0 0
        %543 = vmatprep.subr.bf16.mxu0 0
        %544 = vmatpush1.bf16.msra.mxu0 0
        %545 = vmatprep.subr.bf16.mxu0 0
        %546 = vmatpush1.bf16.msra.mxu0 0
        %547 = vmatprep.subr.bf16.mxu0 0
        %548 = vmatpush1.bf16.msra.mxu0 0
        %549 = vmatprep.subr.bf16.mxu0 0
        %550 = vmatpush1.bf16.msra.mxu0 0
        %551 = vmatprep.subr.bf16.mxu0 0
        %552 = vmatpush1.bf16.msra.mxu0 0
        %553 = vmatprep.mubr.bf16.mxu0 0
        %554 = vmatmul.mubr.bf16.gmra.mrb[0].mxu0 %v516
        %v555 = vpop.f32.mrb[0].mxu0
        %v556 = vadd.f32 0.0, %v555
        %v557 = vpop.f32.mrb[0].mxu0
        %v558 = vpop.f32.mrb[0].mxu0
        %v559 = vpop.f32.mrb[0].mxu0
        %560 = vdwg.mxu0
        %v561 = vrcp.pop %v512
        %v562 = vmul.f32 %v556, %v561
        %563 = vrot.lane.b32.xlu0 %v330, 112
        %v564 = vpop.permute.xlu0 %563
        %565 = vrot.lane.b32.xlu0 %v330, 80
        %v566 = vpop.permute.xlu0 %565
        %v568 = vsel %vm341, %v564, 0
        %v571 = vsel %vm341, %v566, 0
        %573 = vmatprep.subr.bf16.mxu0 0
        %574 = vmatpush1.bf16.xpose.msra.mxu0 %v571
        %575 = vmatprep.subr.bf16.mxu0 0
        %576 = vmatpush1.bf16.xpose.msra.mxu0 0
        %577 = vmatprep.subr.bf16.mxu0 0
        %578 = vmatpush1.bf16.xpose.msra.mxu0 0
        %579 = vmatprep.subr.bf16.mxu0 0
        %580 = vmatpush1.bf16.xpose.msra.mxu0 0
        %581 = vmatprep.subr.bf16.mxu0 0
        %582 = vmatpush1.bf16.xpose.msra.mxu0 0
        %583 = vmatprep.subr.bf16.mxu0 0
        %584 = vmatpush1.bf16.xpose.msra.mxu0 0
        %585 = vmatprep.subr.bf16.mxu0 0
        %586 = vmatpush1.bf16.xpose.msra.mxu0 0
        %587 = vmatprep.subr.bf16.mxu0 0
        %588 = vmatpush1.bf16.xpose.msra.mxu0 0
        %589 = vmatprep.subr.bf16.mxu0 0
        %590 = vmatpush1.bf16.xpose.msra.mxu0 0
        %591 = vmatprep.subr.bf16.mxu0 0
        %592 = vmatpush1.bf16.xpose.msra.mxu0 0
        %593 = vmatprep.subr.bf16.mxu0 0
        %594 = vmatpush1.bf16.xpose.msra.mxu0 0
        %595 = vmatprep.subr.bf16.mxu0 0
        %596 = vmatpush1.bf16.xpose.msra.mxu0 0
        %597 = vmatprep.subr.bf16.mxu0 0
        %598 = vmatpush1.bf16.xpose.msra.mxu0 0
        %599 = vmatprep.subr.bf16.mxu0 0
        %600 = vmatpush1.bf16.xpose.msra.mxu0 0
        %601 = vmatprep.subr.bf16.mxu0 0
        %602 = vmatpush1.bf16.xpose.msra.mxu0 0
        %603 = vmatprep.subr.bf16.mxu0 0
        %604 = vmatpush1.bf16.xpose.msra.mxu0 0
        %605 = vmatprep.mubr.bf16.mxu0 0
        %606 = vmatmul.mubr.bf16.gmra.mrb[0].mxu0 %v568
        %v607 = vpop.f32.mrb[0].mxu0
        %v608 = vadd.f32 %v336, %v607
        %v609 = vpop.f32.mrb[0].mxu0
        %v610 = vpop.f32.mrb[0].mxu0
        %v611 = vpop.f32.mrb[0].mxu0
        %612 = vdwg.mxu0
        %v613 = vsel %vm341, %v608, -inf
        %614 = vmax.xlane.f32.xlu0 %v613
        %v615 = vpop.xlane.xlu0 %614
        %v616 = vsub.f32 %v608, %v615
        %v617 = vpack.c.bf16 %v616, %v616
        %v619 = vmul.bf16 %v617, 1069105081
        %v620 = vpow.bf16.pop %v619
        %v621 = vunpack.c.l.bf16 %v620
        %v622 = vsel %vm341, %v621, 0.0
        %623 = vadd.xlane.f32.xlu0 %v622
        %v624 = vpop.xlane.xlu0 %623
        %625 = vrot.lane.b32.xlu0 %v330, 48
        %v626 = vpop.permute.xlu0 %625
        %v628 = vsel %vm341, %v620, 0
        %v631 = vsel %vm405, %v626, 0
        %633 = vmatprep.subr.bf16.mxu0 0
        %634 = vmatpush1.bf16.msra.mxu0 %v631
        %635 = vmatprep.subr.bf16.mxu0 0
        %636 = vmatpush1.bf16.msra.mxu0 0
        %637 = vmatprep.subr.bf16.mxu0 0
        %638 = vmatpush1.bf16.msra.mxu0 0
        %639 = vmatprep.subr.bf16.mxu0 0
        %640 = vmatpush1.bf16.msra.mxu0 0
        %641 = vmatprep.subr.bf16.mxu0 0
        %642 = vmatpush1.bf16.msra.mxu0 0
        %643 = vmatprep.subr.bf16.mxu0 0
        %644 = vmatpush1.bf16.msra.mxu0 0
        %645 = vmatprep.subr.bf16.mxu0 0
        %646 = vmatpush1.bf16.msra.mxu0 0
        %647 = vmatprep.subr.bf16.mxu0 0
        %648 = vmatpush1.bf16.msra.mxu0 0
        %649 = vmatprep.subr.bf16.mxu0 0
        %650 = vmatpush1.bf16.msra.mxu0 0
        %651 = vmatprep.subr.bf16.mxu0 0
        %652 = vmatpush1.bf16.msra.mxu0 0
        %653 = vmatprep.subr.bf16.mxu0 0
        %654 = vmatpush1.bf16.msra.mxu0 0
        %655 = vmatprep.subr.bf16.mxu0 0
        %656 = vmatpush1.bf16.msra.mxu0 0
        %657 = vmatprep.subr.bf16.mxu0 0
        %658 = vmatpush1.bf16.msra.mxu0 0
        %659 = vmatprep.subr.bf16.mxu0 0
        %660 = vmatpush1.bf16.msra.mxu0 0
        %661 = vmatprep.subr.bf16.mxu0 0
        %662 = vmatpush1.bf16.msra.mxu0 0
        %663 = vmatprep.subr.bf16.mxu0 0
        %664 = vmatpush1.bf16.msra.mxu0 0
        %665 = vmatprep.mubr.bf16.mxu0 0
        %666 = vmatmul.mubr.bf16.gmra.mrb[0].mxu0 %v628
        %v667 = vpop.f32.mrb[0].mxu0
        %v668 = vadd.f32 0.0, %v667
        %v669 = vpop.f32.mrb[0].mxu0
        %v670 = vpop.f32.mrb[0].mxu0
        %v671 = vpop.f32.mrb[0].mxu0
        %672 = vdwg.mxu0
        %v673 = vrcp.pop %v624
        %v674 = vmul.f32 %v668, %v673
        %675 = vrot.lane.b32.xlu0 %v330, 104
        %v676 = vpop.permute.xlu0 %675
        %677 = vrot.lane.b32.xlu0 %v330, 72
        %v678 = vpop.permute.xlu0 %677
        %v680 = vsel %vm341, %v676, 0
        %v683 = vsel %vm341, %v678, 0
        %685 = vmatprep.subr.bf16.mxu0 0
        %686 = vmatpush1.bf16.xpose.msra.mxu0 %v683
        %687 = vmatprep.subr.bf16.mxu0 0
        %688 = vmatpush1.bf16.xpose.msra.mxu0 0
        %689 = vmatprep.subr.bf16.mxu0 0
        %690 = vmatpush1.bf16.xpose.msra.mxu0 0
        %691 = vmatprep.subr.bf16.mxu0 0
        %692 = vmatpush1.bf16.xpose.msra.mxu0 0
        %693 = vmatprep.subr.bf16.mxu0 0
        %694 = vmatpush1.bf16.xpose.msra.mxu0 0
        %695 = vmatprep.subr.bf16.mxu0 0
        %696 = vmatpush1.bf16.xpose.msra.mxu0 0
        %697 = vmatprep.subr.bf16.mxu0 0
        %698 = vmatpush1.bf16.xpose.msra.mxu0 0
        %699 = vmatprep.subr.bf16.mxu0 0
        %700 = vmatpush1.bf16.xpose.msra.mxu0 0
        %701 = vmatprep.subr.bf16.mxu0 0
        %702 = vmatpush1.bf16.xpose.msra.mxu0 0
        %703 = vmatprep.subr.bf16.mxu0 0
        %704 = vmatpush1.bf16.xpose.msra.mxu0 0
        %705 = vmatprep.subr.bf16.mxu0 0
        %706 = vmatpush1.bf16.xpose.msra.mxu0 0
        %707 = vmatprep.subr.bf16.mxu0 0
        %708 = vmatpush1.bf16.xpose.msra.mxu0 0
        %709 = vmatprep.subr.bf16.mxu0 0
        %710 = vmatpush1.bf16.xpose.msra.mxu0 0
        %711 = vmatprep.subr.bf16.mxu0 0
        %712 = vmatpush1.bf16.xpose.msra.mxu0 0
        %713 = vmatprep.subr.bf16.mxu0 0
        %714 = vmatpush1.bf16.xpose.msra.mxu0 0
        %715 = vmatprep.subr.bf16.mxu0 0
        %716 = vmatpush1.bf16.xpose.msra.mxu0 0
        %717 = vmatprep.mubr.bf16.mxu0 0
        %718 = vmatmul.mubr.bf16.gmra.mrb[0].mxu0 %v680
        %v719 = vpop.f32.mrb[0].mxu0
        %v720 = vadd.f32 %v336, %v719
        %v721 = vpop.f32.mrb[0].mxu0
        %v722 = vpop.f32.mrb[0].mxu0
        %v723 = vpop.f32.mrb[0].mxu0
        %724 = vdwg.mxu0
        %v725 = vsel %vm341, %v720, -inf
        %726 = vmax.xlane.f32.xlu0 %v725
        %v727 = vpop.xlane.xlu0 %726
        %v728 = vsub.f32 %v720, %v727
        %v729 = vpack.c.bf16 %v728, %v728
        %v731 = vmul.bf16 %v729, 1069105081
        %v732 = vpow.bf16.pop %v731
        %v733 = vunpack.c.l.bf16 %v732
        %v734 = vsel %vm341, %v733, 0.0
        %735 = vadd.xlane.f32.xlu0 %v734
        %v736 = vpop.xlane.xlu0 %735
        %737 = vrot.lane.b32.xlu0 %v330, 40
        %v738 = vpop.permute.xlu0 %737
        %v740 = vsel %vm341, %v732, 0
        %v743 = vsel %vm405, %v738, 0
        %745 = vmatprep.subr.bf16.mxu0 0
        %746 = vmatpush1.bf16.msra.mxu0 %v743
        %747 = vmatprep.subr.bf16.mxu0 0
        %748 = vmatpush1.bf16.msra.mxu0 0
        %749 = vmatprep.subr.bf16.mxu0 0
        %750 = vmatpush1.bf16.msra.mxu0 0
        %751 = vmatprep.subr.bf16.mxu0 0
        %752 = vmatpush1.bf16.msra.mxu0 0
        %753 = vmatprep.subr.bf16.mxu0 0
        %754 = vmatpush1.bf16.msra.mxu0 0
        %755 = vmatprep.subr.bf16.mxu0 0
        %756 = vmatpush1.bf16.msra.mxu0 0
        %757 = vmatprep.subr.bf16.mxu0 0
        %758 = vmatpush1.bf16.msra.mxu0 0
        %759 = vmatprep.subr.bf16.mxu0 0
        %760 = vmatpush1.bf16.msra.mxu0 0
        %761 = vmatprep.subr.bf16.mxu0 0
        %762 = vmatpush1.bf16.msra.mxu0 0
        %763 = vmatprep.subr.bf16.mxu0 0
        %764 = vmatpush1.bf16.msra.mxu0 0
        %765 = vmatprep.subr.bf16.mxu0 0
        %766 = vmatpush1.bf16.msra.mxu0 0
        %767 = vmatprep.subr.bf16.mxu0 0
        %768 = vmatpush1.bf16.msra.mxu0 0
        %769 = vmatprep.subr.bf16.mxu0 0
        %770 = vmatpush1.bf16.msra.mxu0 0
        %771 = vmatprep.subr.bf16.mxu0 0
        %772 = vmatpush1.bf16.msra.mxu0 0
        %773 = vmatprep.subr.bf16.mxu0 0
        %774 = vmatpush1.bf16.msra.mxu0 0
        %775 = vmatprep.subr.bf16.mxu0 0
        %776 = vmatpush1.bf16.msra.mxu0 0
        %777 = vmatprep.mubr.bf16.mxu0 0
        %778 = vmatmul.mubr.bf16.gmra.mrb[0].mxu0 %v740
        %v779 = vpop.f32.mrb[0].mxu0
        %v780 = vadd.f32 0.0, %v779
        %v781 = vpop.f32.mrb[0].mxu0
        %v782 = vpop.f32.mrb[0].mxu0
        %v783 = vpop.f32.mrb[0].mxu0
        %784 = vdwg.mxu0
        %v785 = vrcp.pop %v736
        %v786 = vmul.f32 %v780, %v785
        %788 = vrot.lane.b32.xlu0 %v562, 8
        %v789 = vpop.permute.xlu0 %788
        %792 = vrot.lane.b32.xlu0 %v674, 16
        %v793 = vpop.permute.xlu0 %792
        %796 = vrot.lane.b32.xlu0 %v786, 24
        %v797 = vpop.permute.xlu0 %796
        %v799 = vsel %vm341, %v450, %v789
        %vm800 = vcmask 130048
        %v801 = vsel %vm800, %v799, %v793
        %vm802 = vcmask 195584
        %v803 = vsel %vm802, %v801, %v797
        %804 = vst.msk [vmem:[%s252] sm:$0xff] %vm286, %v803
        %s805 = sand.u32 %s138, 1
        %s806 = scalar_lea.sflag [#allocation4], %s805
        %s807 = sand.u32 %s138, 1
        %s808 = smul.addr %s807, 8
        %s809 = scalar_lea.vmem [#allocation7], %s808
        // Predicated region
        $region45: #{tpu_custom_call.1} parent=35 // pred_check
          %p810 = pneg %p148
        $region46: #{tpu_custom_call.1} parent=35 // pred_check_branch
          %812 = sbr.rel (%p810) target = $region48
        $region47: #{tpu_custom_call.1} parent=35 // pred_region
          %s814 = ssub.s32 128, 128
          %815 = vsyncadd %s806, %s814
          %s816 = sadd.s32 %s27, %s26
          %s817 = smul.addr %s816, 128
          %s818 = scalar_lea.hbm %s4, %s817
          %s820 = sshll.u32 %s809, 4
          %s821 = int_to_ptr.vmem [resolvable:$true] %s820
          %823 = dma.vmem_to_hbm [thread:$0]  %s821, 128, %s818, %s806
        $region48: #{tpu_custom_call.1} parent=35 // pred_fallthru
          _
      $region36: #{tpu_custom_call.1} parent=5 // pred_fallthru
        _
      %p824 = scmp.le.s32.totalorder 2, %s17
      // Predicated region
      $region49: #{tpu_custom_call.1} parent=5 // pred_check
        %p825 = pneg %p824
      $region50: #{tpu_custom_call.1} parent=5 // pred_check_branch
        %827 = sbr.rel (%p825) target = $region52
      $region51: #{tpu_custom_call.1} parent=5 // pred_region
        %s828 = ssub.s32 %s17, 2
        // Predicated region
        $region53: #{tpu_custom_call.1} parent=51 // pred_check
          %p829 = pneg %p154
        $region54: #{tpu_custom_call.1} parent=51 // pred_check_branch
          %831 = sbr.rel (%p829) target = $region56
        $region55: #{tpu_custom_call.1} parent=51 // pred_region
          %s832 = sand.u32 %s139, 1
          %s833 = scalar_lea.sflag [#allocation4], %s832
          %s834 = sand.u32 %s139, 1
          %s835 = smul.addr %s834, 8
          %s836 = scalar_lea.vmem [#allocation7], %s835
          %837 = dma.done %s833, 128
        $region56: #{tpu_custom_call.1} parent=51 // pred_fallthru
          _
      $region52: #{tpu_custom_call.1} parent=5 // pred_fallthru
        _
    $region6: #{tpu_custom_call.1} parent=1 // loop_footer
      %s21 = sadd.s32 1, %s17
    $region7: #{tpu_custom_call.1} parent=1 // loop_footer_branch
      %16 = sbr.rel target = $region3
    $region8: #{tpu_custom_call.1} parent=1 // loop_exit
      _
    %838 = vsyncpa [#allocation3], 1
    %s839 = scalar_lea.sflag [#allocation3], 1
    %840 = vsyncpa %s839, 1
    %841 = vsyncpa [#allocation6], 1
    %842 = vsyncpa [#allocation4], 1
    %s843 = scalar_lea.sflag [#allocation4], 1
    %844 = vsyncpa %s843, 1

</llo_original>
